<compile_context>
chip_gen: v7x
topology: tpu7x:2x2x1
jax: 0.10.0
libtpu: 0.0.40
codegen_flags: <defaults>
</compile_context>

<pallas_src>
import functools

import jax
import jax.numpy as jnp
from jax.experimental import pallas as pl
from jax.experimental.pallas import tpu as pltpu

_EPS = 1e-5
_NEG_SLOPE = 0.01  # torch.nn.LeakyReLU default
_LANE = 128


def _round_up(n, m=_LANE):
    return ((n + m - 1) // m) * m


# ----------------------------- fused kernel ---------------------------------

def _make_fused_ae_kernel(n_enc, n_dec, batch):
    """Fused kernel: n_enc encoder blocks, n_dec decoder (Linear->BN->LeakyReLU)
    blocks and one final Linear, fully unrolled at trace time. All activations
    stay in VMEM/vregs; weights/vectors are indexed out of two stacked refs
    with static slices (free)."""
    n_bn = n_enc + n_dec
    inv_b = 1.0 / float(batch)

    def kernel(x_ref, w_ref, vec_ref, embed_ref, recon_ref):
        # w_ref  : [n_bn + 1, P, P]  bf16  (pre-transposed to [Din, Dout])
        # vec_ref: [2*n_bn + 1, P]   f32   (gamma_l, beta_l, ..., final bias)

        def bn_block(h, l):
            # Linear (bias omitted: exactly cancelled by the BN batch-mean
            # subtraction) -> BatchNorm1d (training stats) -> LeakyReLU.
            y = jnp.dot(h.astype(jnp.bfloat16), w_ref[l],
                        preferred_element_type=jnp.float32)          # [B, P] f32
            # single-pass batch statistics
            s = jnp.sum(y, axis=0, keepdims=True)                    # [1, P]
            ss = jnp.sum(y * y, axis=0, keepdims=True)               # [1, P]
            mean = s * inv_b
            var = jnp.maximum(ss * inv_b - mean * mean, 0.0)         # biased var
            scale = vec_ref[2 * l] * jax.lax.rsqrt(var + _EPS)       # gamma folded
            y_bn = (y - mean) * scale + vec_ref[2 * l + 1]
            return jnp.where(y_bn > 0, y_bn, _NEG_SLOPE * y_bn)

        h = x_ref[...]
        for l in range(n_enc):
            h = bn_block(h, l)
        embed_ref[...] = h
        for l in range(n_enc, n_bn):
            h = bn_block(h, l)
        recon_ref[...] = (
            jnp.dot(h.astype(jnp.bfloat16), w_ref[n_bn],
                    preferred_element_type=jnp.float32)
            + vec_ref[2 * n_bn]
        )

    return kernel


_VMEM = pl.BlockSpec(memory_space=pltpu.MemorySpace.VMEM)


# ----------------------------- parameters -----------------------------------

def make_ae_params(key, in_dim, hid_dim, layers):
    """Deterministic synthetic parameters matching the PyTorch module's shapes
    (Linear weight [Dout, Din], bias [1, Dout]; BN gamma=1, beta=0)."""
    if not isinstance(hid_dim, list):
        hid_dim = [hid_dim] * layers
    dims = [in_dim] + hid_dim

    def init_linear(k, dout, din):
        kw, kb = jax.random.split(k)
        bound = 1.0 / jnp.sqrt(din)
        w = jax.random.uniform(kw, (dout, din), jnp.float32, -bound, bound)
        b = jax.random.uniform(kb, (1, dout), jnp.float32, -bound, bound)
        return w, b

    def init_bn(dout):
        return jnp.ones((1, dout), jnp.float32), jnp.zeros((1, dout), jnp.float32)

    params = {"encoder": [], "decoder": []}
    keys = jax.random.split(key, 2 * layers + 1)
    ki = 0

    # encoder: Linear(dims[i], dims[i+1]) + BN(dims[i+1]) + act
    for i in range(layers):
        w, b = init_linear(keys[ki], dims[i + 1], dims[i]); ki += 1
        g, bt = init_bn(dims[i + 1])
        params["encoder"].append((w, b, g, bt))

    # decoder: i in range(layers, 1, -1): Linear(dims[i], dims[i-1]) + BN(dims[i-1]) + act
    for i in range(layers, 1, -1):
        w, b = init_linear(keys[ki], dims[i - 1], dims[i]); ki += 1
        g, bt = init_bn(dims[i - 1])
        params["decoder"].append((w, b, g, bt))

    # final decoder Linear(dims[1], dims[0])
    w, b = init_linear(keys[ki], dims[0], dims[1]); ki += 1
    params["decoder_final"] = (w, b)
    return params


def prepare_packed_params(params):
    """Host-side, one-time prep:
      * transpose every Linear weight to [Din, Dout],
      * zero-pad every feature dim to a single common width P (mult. of 128),
      * stack all weights into one [n_mats, P, P] bf16 array,
      * stack gamma/beta per BN block + final bias into one [n_vecs, P] f32 array.
    Padded lanes are zero-filled (the kernel's zero-lane invariant depends on
    gamma / beta / final-bias pad values being exactly zero)."""
    all_dims = []
    for (w, _b, _g, _bt) in params["encoder"] + params["decoder"]:
        all_dims.extend(w.shape)
    wf, bf = params["decoder_final"]
    all_dims.extend(wf.shape)
    P = max(_round_up(d) for d in all_dims)

    def pad_wT(w):  # [Dout, Din] -> [P, P] bf16
        dout, din = w.shape
        return jnp.pad(w.T, ((0, P - din), (0, P - dout))).astype(jnp.bfloat16)

    def pad_vec(v):  # [1, D] -> [P] f32 (zero-padded)
        return jnp.pad(v[0], (0, P - v.shape[1])).astype(jnp.float32)

    w_list, vec_list = [], []
    for (w, _b, g, bt) in params["encoder"] + params["decoder"]:
        w_list.append(pad_wT(w))
        vec_list.append(pad_vec(g))
        vec_list.append(pad_vec(bt))
    w_list.append(pad_wT(wf))
    vec_list.append(pad_vec(bf))

    w_stack = jnp.stack(w_list)     # [n_bn+1, P, P] bf16
    vec_stack = jnp.stack(vec_list)  # [2*n_bn+1, P] f32
    return w_stack, vec_stack, P


# ----------------------------- AE forward -----------------------------------

@functools.partial(jax.jit, static_argnames=("n_enc", "n_dec"))
def ae_forward_padded(w_stack, vec_stack, x_pad, *, n_enc, n_dec):
    """Single fused Pallas call for the whole AE forward on pre-padded input
    x_pad [B, P]. Returns padded (embed [B, P], reconstruct [B, P])."""
    B, P = x_pad.shape

    # VMEM budget: all operands resident (no grid), doubled for Pallas' operand
    # buffers, + live f32 activations + headroom. Must fit v7x's 64 MiB VMEM.
    operand_bytes = (w_stack.size * w_stack.dtype.itemsize
                     + vec_stack.size * 4
                     + 3 * B * P * 4)                 # x + both outputs
    vmem_bytes = int(2 * operand_bytes + 8 * B * P * 4 + (4 << 20))
    assert vmem_bytes <= 64 * 1024 * 1024, (
        "fully-fused AE does not fit v7x VMEM; switch to HBM weights + "
        "double-buffered per-layer weight DMA")

    kernel = _make_fused_ae_kernel(n_enc, n_dec, B)
    embed_pad, recon_pad = pl.pallas_call(
        kernel,
        out_shape=(
            jax.ShapeDtypeStruct((B, P), jnp.float32),
            jax.ShapeDtypeStruct((B, P), jnp.float32),
        ),
        in_specs=[_VMEM, _VMEM, _VMEM],
        out_specs=(_VMEM, _VMEM),
        compiler_params=pltpu.CompilerParams(vmem_limit_bytes=vmem_bytes),
    )(x_pad, w_stack, vec_stack)
    return embed_pad, recon_pad


# ----------------------------- pure-JAX reference ----------------------------

def ae_forward_ref(params, x):
    def bn_block(h, w, b, g, bt):
        y = h @ w.T + b
        mean = jnp.mean(y, axis=0, keepdims=True)
        var = jnp.mean((y - mean) ** 2, axis=0, keepdims=True)
        y = g * (y - mean) * jax.lax.rsqrt(var + _EPS) + bt
        return jnp.where(y > 0, y, _NEG_SLOPE * y)

    h = x
    for (w, b, g, bt) in params["encoder"]:
        h = bn_block(h, w, b, g, bt)
    embed = h
    for (w, b, g, bt) in params["decoder"]:
        h = bn_block(h, w, b, g, bt)
    wf, bf = params["decoder_final"]
    return embed, h @ wf.T + bf


# ----------------------------- main -----------------------------------------

if __name__ == "__main__":
    IN_DIM, HID_DIM, LAYERS, BATCH = 16, 32, 2, 8

    key = jax.random.PRNGKey(0)
    kx, kp = jax.random.split(key)
    x = jax.random.normal(kx, (BATCH, IN_DIM), jnp.float32)

    params = make_ae_params(kp, IN_DIM, HID_DIM, LAYERS)
    w_stack, vec_stack, P = prepare_packed_params(params)

    n_enc = len(params["encoder"])
    n_dec = len(params["decoder"])
    hid_list = [HID_DIM] * LAYERS if not isinstance(HID_DIM, list) else HID_DIM
    embed_dim = hid_list[-1]

    # One-time pad outside the hot path (kernel consumes / returns padded slabs).
    x_pad = jnp.pad(x, ((0, 0), (0, P - IN_DIM)))

    embed_pad, recon_pad = ae_forward_padded(
        w_stack, vec_stack, x_pad, n_enc=n_enc, n_dec=n_dec)
    jax.block_until_ready(embed_pad)
    jax.block_until_ready(recon_pad)

    embed = embed_pad[:, :embed_dim]
    reconstruct = recon_pad[:, :IN_DIM]
    assert embed.shape == (BATCH, embed_dim)
    assert reconstruct.shape == (BATCH, IN_DIM)

    # Numerical check against a pure-JAX f32 reference. Tolerance is loosened
    # because the kernel runs bf16 matmul operands through the MXU and the BN
    # rsqrt(var+eps) amplifies small operand rounding.
    e_ref, r_ref = ae_forward_ref(params, x)
    assert jnp.allclose(embed, e_ref, atol=1e-1, rtol=5e-2), (
        float(jnp.max(jnp.abs(embed - e_ref))))
    assert jnp.allclose(reconstruct, r_ref, atol=1e-1, rtol=5e-2), (
        float(jnp.max(jnp.abs(reconstruct - r_ref))))

    print("KERNEL_OK")
</pallas_src>

<mosaic_0001>
module attributes {stable_mosaic.version = 11 : i64} {
  func.func @kernel(%arg0: memref<8x128xf32, #tpu.memory_space<vmem>>, %arg1: memref<4x128x128xbf16, #tpu.memory_space<vmem>>, %arg2: memref<7x128xf32, #tpu.memory_space<vmem>>, %arg3: memref<8x128xf32, #tpu.memory_space<vmem>>, %arg4: memref<8x128xf32, #tpu.memory_space<vmem>>) attributes {dimension_semantics = [], scalar_prefetch = 0 : i64, scratch_operands = 0 : i64, tpu.core_type = #tpu.core_type<tc>} {
    %c0 = arith.constant 0 : index
    %c0_0 = arith.constant 0 : index
    %0 = vector.load %arg0[%c0, %c0_0] : memref<8x128xf32, #tpu.memory_space<vmem>>, vector<8x128xf32>
    %1 = arith.truncf %0 : vector<8x128xf32> to vector<8x128xbf16>
    %c0_1 = arith.constant 0 : index
    %c0_2 = arith.constant 0 : index
    %c0_3 = arith.constant 0 : index
    %2 = vector.load %arg1[%c0_1, %c0_2, %c0_3] : memref<4x128x128xbf16, #tpu.memory_space<vmem>>, vector<1x128x128xbf16>
    %3 = vector.shape_cast %2 : vector<1x128x128xbf16> to vector<128x128xbf16>
    %cst = arith.constant dense<0.000000e+00> : vector<8x128xf32>
    %4 = tpu.matmul %1, %3, %cst {dimension_numbers = #tpu.dot_dimension_numbers<[1], [0], [0], [1], [0, 0, 1, 1], [], []>} : vector<8x128xbf16>, vector<128x128xbf16>, vector<8x128xf32> -> vector<8x128xf32>
    %cst_4 = arith.constant dense<0.000000e+00> : vector<128xf32>
    %5 = vector.multi_reduction <add>, %4, %cst_4 [0] : vector<8x128xf32> to vector<128xf32>
    %6 = vector.shape_cast %5 : vector<128xf32> to vector<1x128xf32>
    %7 = arith.mulf %4, %4 : vector<8x128xf32>
    %cst_5 = arith.constant dense<0.000000e+00> : vector<128xf32>
    %8 = vector.multi_reduction <add>, %7, %cst_5 [0] : vector<8x128xf32> to vector<128xf32>
    %9 = vector.shape_cast %8 : vector<128xf32> to vector<1x128xf32>
    %cst_6 = arith.constant 1.250000e-01 : f32
    %10 = vector.broadcast %cst_6 : f32 to vector<1x128xf32>
    %11 = arith.mulf %6, %10 : vector<1x128xf32>
    %cst_7 = arith.constant 1.250000e-01 : f32
    %12 = vector.broadcast %cst_7 : f32 to vector<1x128xf32>
    %13 = arith.mulf %9, %12 : vector<1x128xf32>
    %14 = arith.mulf %11, %11 : vector<1x128xf32>
    %15 = arith.subf %13, %14 : vector<1x128xf32>
    %cst_8 = arith.constant 0.000000e+00 : f32
    %16 = vector.broadcast %cst_8 : f32 to vector<1x128xf32>
    %17 = arith.maximumf %15, %16 : vector<1x128xf32>
    %c0_9 = arith.constant 0 : index
    %c0_10 = arith.constant 0 : index
    %18 = vector.load %arg2[%c0_9, %c0_10] : memref<7x128xf32, #tpu.memory_space<vmem>>, vector<1x128xf32>
    %19 = vector.shape_cast %18 : vector<1x128xf32> to vector<128xf32>
    %cst_11 = arith.constant 9.99999974E-6 : f32
    %20 = vector.broadcast %cst_11 : f32 to vector<1x128xf32>
    %21 = arith.addf %17, %20 : vector<1x128xf32>
    %22 = math.rsqrt %21 : vector<1x128xf32>
    %23 = vector.shape_cast %19 : vector<128xf32> to vector<1x128xf32>
    %24 = arith.mulf %23, %22 : vector<1x128xf32>
    %25 = vector.broadcast %11 : vector<1x128xf32> to vector<8x128xf32>
    %26 = arith.subf %4, %25 : vector<8x128xf32>
    %27 = vector.broadcast %24 : vector<1x128xf32> to vector<8x128xf32>
    %28 = arith.mulf %26, %27 : vector<8x128xf32>
    %c1 = arith.constant 1 : index
    %c0_12 = arith.constant 0 : index
    %29 = vector.load %arg2[%c1, %c0_12] : memref<7x128xf32, #tpu.memory_space<vmem>>, vector<1x128xf32>
    %30 = vector.shape_cast %29 : vector<1x128xf32> to vector<128xf32>
    %31 = vector.shape_cast %30 : vector<128xf32> to vector<1x128xf32>
    %32 = vector.broadcast %31 : vector<1x128xf32> to vector<8x128xf32>
    %33 = arith.addf %28, %32 : vector<8x128xf32>
    %cst_13 = arith.constant 0.000000e+00 : f32
    %34 = vector.broadcast %cst_13 : f32 to vector<8x128xf32>
    %35 = arith.cmpf ogt, %33, %34 : vector<8x128xf32>
    %cst_14 = arith.constant 0.00999999977 : f32
    %36 = vector.broadcast %cst_14 : f32 to vector<8x128xf32>
    %37 = arith.mulf %36, %33 : vector<8x128xf32>
    %38 = arith.select %35, %33, %37 : vector<8x128xi1>, vector<8x128xf32>
    %39 = arith.truncf %38 : vector<8x128xf32> to vector<8x128xbf16>
    %c1_15 = arith.constant 1 : index
    %c0_16 = arith.constant 0 : index
    %c0_17 = arith.constant 0 : index
    %40 = vector.load %arg1[%c1_15, %c0_16, %c0_17] : memref<4x128x128xbf16, #tpu.memory_space<vmem>>, vector<1x128x128xbf16>
    %41 = vector.shape_cast %40 : vector<1x128x128xbf16> to vector<128x128xbf16>
    %cst_18 = arith.constant dense<0.000000e+00> : vector<8x128xf32>
    %42 = tpu.matmul %39, %41, %cst_18 {dimension_numbers = #tpu.dot_dimension_numbers<[1], [0], [0], [1], [0, 0, 1, 1], [], []>} : vector<8x128xbf16>, vector<128x128xbf16>, vector<8x128xf32> -> vector<8x128xf32>
    %cst_19 = arith.constant dense<0.000000e+00> : vector<128xf32>
    %43 = vector.multi_reduction <add>, %42, %cst_19 [0] : vector<8x128xf32> to vector<128xf32>
    %44 = vector.shape_cast %43 : vector<128xf32> to vector<1x128xf32>
    %45 = arith.mulf %42, %42 : vector<8x128xf32>
    %cst_20 = arith.constant dense<0.000000e+00> : vector<128xf32>
    %46 = vector.multi_reduction <add>, %45, %cst_20 [0] : vector<8x128xf32> to vector<128xf32>
    %47 = vector.shape_cast %46 : vector<128xf32> to vector<1x128xf32>
    %cst_21 = arith.constant 1.250000e-01 : f32
    %48 = vector.broadcast %cst_21 : f32 to vector<1x128xf32>
    %49 = arith.mulf %44, %48 : vector<1x128xf32>
    %cst_22 = arith.constant 1.250000e-01 : f32
    %50 = vector.broadcast %cst_22 : f32 to vector<1x128xf32>
    %51 = arith.mulf %47, %50 : vector<1x128xf32>
    %52 = arith.mulf %49, %49 : vector<1x128xf32>
    %53 = arith.subf %51, %52 : vector<1x128xf32>
    %cst_23 = arith.constant 0.000000e+00 : f32
    %54 = vector.broadcast %cst_23 : f32 to vector<1x128xf32>
    %55 = arith.maximumf %53, %54 : vector<1x128xf32>
    %c2 = arith.constant 2 : index
    %c0_24 = arith.constant 0 : index
    %56 = vector.load %arg2[%c2, %c0_24] : memref<7x128xf32, #tpu.memory_space<vmem>>, vector<1x128xf32>
    %57 = vector.shape_cast %56 : vector<1x128xf32> to vector<128xf32>
    %cst_25 = arith.constant 9.99999974E-6 : f32
    %58 = vector.broadcast %cst_25 : f32 to vector<1x128xf32>
    %59 = arith.addf %55, %58 : vector<1x128xf32>
    %60 = math.rsqrt %59 : vector<1x128xf32>
    %61 = vector.shape_cast %57 : vector<128xf32> to vector<1x128xf32>
    %62 = arith.mulf %61, %60 : vector<1x128xf32>
    %63 = vector.broadcast %49 : vector<1x128xf32> to vector<8x128xf32>
    %64 = arith.subf %42, %63 : vector<8x128xf32>
    %65 = vector.broadcast %62 : vector<1x128xf32> to vector<8x128xf32>
    %66 = arith.mulf %64, %65 : vector<8x128xf32>
    %c3 = arith.constant 3 : index
    %c0_26 = arith.constant 0 : index
    %67 = vector.load %arg2[%c3, %c0_26] : memref<7x128xf32, #tpu.memory_space<vmem>>, vector<1x128xf32>
    %68 = vector.shape_cast %67 : vector<1x128xf32> to vector<128xf32>
    %69 = vector.shape_cast %68 : vector<128xf32> to vector<1x128xf32>
    %70 = vector.broadcast %69 : vector<1x128xf32> to vector<8x128xf32>
    %71 = arith.addf %66, %70 : vector<8x128xf32>
    %cst_27 = arith.constant 0.000000e+00 : f32
    %72 = vector.broadcast %cst_27 : f32 to vector<8x128xf32>
    %73 = arith.cmpf ogt, %71, %72 : vector<8x128xf32>
    %cst_28 = arith.constant 0.00999999977 : f32
    %74 = vector.broadcast %cst_28 : f32 to vector<8x128xf32>
    %75 = arith.mulf %74, %71 : vector<8x128xf32>
    %76 = arith.select %73, %71, %75 : vector<8x128xi1>, vector<8x128xf32>
    %c0_29 = arith.constant 0 : index
    %c0_30 = arith.constant 0 : index
    %77 = vector.load %arg3[%c0_29, %c0_30] : memref<8x128xf32, #tpu.memory_space<vmem>>, vector<8x128xf32>
    tpu.vector_store %arg3[%c0_29, %c0_30], %76 {strides = array<i32>} : memref<8x128xf32, #tpu.memory_space<vmem>>, vector<8x128xf32>,
    %78 = arith.truncf %76 : vector<8x128xf32> to vector<8x128xbf16>
    %c2_31 = arith.constant 2 : index
    %c0_32 = arith.constant 0 : index
    %c0_33 = arith.constant 0 : index
    %79 = vector.load %arg1[%c2_31, %c0_32, %c0_33] : memref<4x128x128xbf16, #tpu.memory_space<vmem>>, vector<1x128x128xbf16>
    %80 = vector.shape_cast %79 : vector<1x128x128xbf16> to vector<128x128xbf16>
    %cst_34 = arith.constant dense<0.000000e+00> : vector<8x128xf32>
    %81 = tpu.matmul %78, %80, %cst_34 {dimension_numbers = #tpu.dot_dimension_numbers<[1], [0], [0], [1], [0, 0, 1, 1], [], []>} : vector<8x128xbf16>, vector<128x128xbf16>, vector<8x128xf32> -> vector<8x128xf32>
    %cst_35 = arith.constant dense<0.000000e+00> : vector<128xf32>
    %82 = vector.multi_reduction <add>, %81, %cst_35 [0] : vector<8x128xf32> to vector<128xf32>
    %83 = vector.shape_cast %82 : vector<128xf32> to vector<1x128xf32>
    %84 = arith.mulf %81, %81 : vector<8x128xf32>
    %cst_36 = arith.constant dense<0.000000e+00> : vector<128xf32>
    %85 = vector.multi_reduction <add>, %84, %cst_36 [0] : vector<8x128xf32> to vector<128xf32>
    %86 = vector.shape_cast %85 : vector<128xf32> to vector<1x128xf32>
    %cst_37 = arith.constant 1.250000e-01 : f32
    %87 = vector.broadcast %cst_37 : f32 to vector<1x128xf32>
    %88 = arith.mulf %83, %87 : vector<1x128xf32>
    %cst_38 = arith.constant 1.250000e-01 : f32
    %89 = vector.broadcast %cst_38 : f32 to vector<1x128xf32>
    %90 = arith.mulf %86, %89 : vector<1x128xf32>
    %91 = arith.mulf %88, %88 : vector<1x128xf32>
    %92 = arith.subf %90, %91 : vector<1x128xf32>
    %cst_39 = arith.constant 0.000000e+00 : f32
    %93 = vector.broadcast %cst_39 : f32 to vector<1x128xf32>
    %94 = arith.maximumf %92, %93 : vector<1x128xf32>
    %c4 = arith.constant 4 : index
    %c0_40 = arith.constant 0 : index
    %95 = vector.load %arg2[%c4, %c0_40] : memref<7x128xf32, #tpu.memory_space<vmem>>, vector<1x128xf32>
    %96 = vector.shape_cast %95 : vector<1x128xf32> to vector<128xf32>
    %cst_41 = arith.constant 9.99999974E-6 : f32
    %97 = vector.broadcast %cst_41 : f32 to vector<1x128xf32>
    %98 = arith.addf %94, %97 : vector<1x128xf32>
    %99 = math.rsqrt %98 : vector<1x128xf32>
    %100 = vector.shape_cast %96 : vector<128xf32> to vector<1x128xf32>
    %101 = arith.mulf %100, %99 : vector<1x128xf32>
    %102 = vector.broadcast %88 : vector<1x128xf32> to vector<8x128xf32>
    %103 = arith.subf %81, %102 : vector<8x128xf32>
    %104 = vector.broadcast %101 : vector<1x128xf32> to vector<8x128xf32>
    %105 = arith.mulf %103, %104 : vector<8x128xf32>
    %c5 = arith.constant 5 : index
    %c0_42 = arith.constant 0 : index
    %106 = vector.load %arg2[%c5, %c0_42] : memref<7x128xf32, #tpu.memory_space<vmem>>, vector<1x128xf32>
    %107 = vector.shape_cast %106 : vector<1x128xf32> to vector<128xf32>
    %108 = vector.shape_cast %107 : vector<128xf32> to vector<1x128xf32>
    %109 = vector.broadcast %108 : vector<1x128xf32> to vector<8x128xf32>
    %110 = arith.addf %105, %109 : vector<8x128xf32>
    %cst_43 = arith.constant 0.000000e+00 : f32
    %111 = vector.broadcast %cst_43 : f32 to vector<8x128xf32>
    %112 = arith.cmpf ogt, %110, %111 : vector<8x128xf32>
    %cst_44 = arith.constant 0.00999999977 : f32
    %113 = vector.broadcast %cst_44 : f32 to vector<8x128xf32>
    %114 = arith.mulf %113, %110 : vector<8x128xf32>
    %115 = arith.select %112, %110, %114 : vector<8x128xi1>, vector<8x128xf32>
    %116 = arith.truncf %115 : vector<8x128xf32> to vector<8x128xbf16>
    %c3_45 = arith.constant 3 : index
    %c0_46 = arith.constant 0 : index
    %c0_47 = arith.constant 0 : index
    %117 = vector.load %arg1[%c3_45, %c0_46, %c0_47] : memref<4x128x128xbf16, #tpu.memory_space<vmem>>, vector<1x128x128xbf16>
    %118 = vector.shape_cast %117 : vector<1x128x128xbf16> to vector<128x128xbf16>
    %cst_48 = arith.constant dense<0.000000e+00> : vector<8x128xf32>
    %119 = tpu.matmul %116, %118, %cst_48 {dimension_numbers = #tpu.dot_dimension_numbers<[1], [0], [0], [1], [0, 0, 1, 1], [], []>} : vector<8x128xbf16>, vector<128x128xbf16>, vector<8x128xf32> -> vector<8x128xf32>
    %c6 = arith.constant 6 : index
    %c0_49 = arith.constant 0 : index
    %120 = vector.load %arg2[%c6, %c0_49] : memref<7x128xf32, #tpu.memory_space<vmem>>, vector<1x128xf32>
    %121 = vector.shape_cast %120 : vector<1x128xf32> to vector<128xf32>
    %122 = vector.shape_cast %121 : vector<128xf32> to vector<1x128xf32>
    %123 = vector.broadcast %122 : vector<1x128xf32> to vector<8x128xf32>
    %124 = arith.addf %119, %123 : vector<8x128xf32>
    %c0_50 = arith.constant 0 : index
    %c0_51 = arith.constant 0 : index
    %125 = vector.load %arg4[%c0_50, %c0_51] : memref<8x128xf32, #tpu.memory_space<vmem>>, vector<8x128xf32>
    tpu.vector_store %arg4[%c0_50, %c0_51], %124 {strides = array<i32>} : memref<8x128xf32, #tpu.memory_space<vmem>>, vector<8x128xf32>,
    return
  }
}

</mosaic_0001>

<llo_original>
// kernel: ae_forward_padded.1
$region0: #{ae_forward_padded.1}
  #allocation0 [shape = 'u32[]', space=smem, size = 0x4, offset = 0x4, fixed_abs, tag = 'smem constant byte address 0x4 - core index']
  #allocation1 [shape = 'u32[144,128]{1,0:T(1,128)}', space=vmem, size = 0x12000, scoped, tag = 'internal scratch']
  %s0 = inlined_call_operand.hbm [shape: f32[8,128], index: 0, kind: input, shape index: {}]
  %s1 = inlined_call_operand.hbm [shape: bf16[4,128,128], index: 1, kind: input, shape index: {}]
  %s2 = inlined_call_operand.hbm [shape: f32[7,128], index: 2, kind: input, shape index: {}]
  %s3 = inlined_call_operand.hbm [shape: f32[8,128], index: 3, kind: output, shape index: {0}]
  %s4 = inlined_call_operand.hbm [shape: f32[8,128], index: 4, kind: output, shape index: {1}]
  %5 = xla_tuple %s3, %s4
  %s6 = sld [smem:[#allocation0]]
  $region42: #{ae_forward_padded.1} parent=0
    _
  %s8 = ssub.s32 1, %s6
  %s9 = scalar_select 0, %s8, %s6
  $region1: #{ae_forward_padded.1} parent=0
    #allocation2 [shape = 'u8[4096]{0}', space=vmem, size = 0x1000, scoped, tag = 'input window, operand 0, single buffered']
    #allocation3 [shape = 's32[1]{0}', space=sflag, size = 0x4, scoped, tag = 'scoped memory for ae_forward_padded.1']
    #allocation4 [shape = 's32[1]{0}', space=sflag, size = 0x4, scoped, tag = 'scoped memory for ae_forward_padded.1']
    #allocation5 [shape = 'u8[131072]{0}', space=vmem, size = 0x20000, scoped, tag = 'input window, operand 1, single buffered']
    #allocation6 [shape = 's32[1]{0}', space=sflag, size = 0x4, scoped, tag = 'scoped memory for ae_forward_padded.1']
    #allocation7 [shape = 'u8[4096]{0}', space=vmem, size = 0x1000, scoped, tag = 'input window, operand 2, single buffered']
    #allocation8 [shape = 'u8[4096]{0}', space=vmem, size = 0x1000, scoped, tag = 'output window, operand 0, single buffered']
    #allocation9 [shape = 'u8[4096]{0}', space=vmem, size = 0x1000, scoped, tag = 'output window, operand 1, single buffered']
    #allocation10 [shape = 's32[1]{0}', space=sflag, size = 0x4, scoped, tag = 'scoped memory for ae_forward_padded.1']
    %10 = vsyncpa [#allocation3], 0
    %11 = vsyncpa [#allocation6], 0
    %12 = vsyncpa [#allocation4], 0
    %13 = vsyncpa [#allocation10], 0
    // Predicated region
    $region2: #{ae_forward_padded.1} parent=1 // pred_check
      _
    $region3: #{ae_forward_padded.1} parent=1 // pred_check_branch
      %15 = sbr.rel (0) target = $region5
    $region4: #{ae_forward_padded.1} parent=1 // pred_region
      %s17 = ssub.s32 128, 128
      %18 = vsyncadd [#allocation3], %s17
      %s20 = sshll.u32 [#allocation2], 4
      %s21 = int_to_ptr.vmem [resolvable:$true] %s20
      %23 = dma.hbm_to_vmem [thread:$0]  %s0, 128, %s21, [#allocation3]
    $region5: #{ae_forward_padded.1} parent=1 // pred_fallthru
      _
    // Predicated region
    $region6: #{ae_forward_padded.1} parent=1 // pred_check
      _
    $region7: #{ae_forward_padded.1} parent=1 // pred_check_branch
      %25 = sbr.rel (0) target = $region9
    $region8: #{ae_forward_padded.1} parent=1 // pred_region
      %s27 = ssub.s32 4096, 4096
      %28 = vsyncadd [#allocation6], %s27
      %s29 = sshll.u32 [#allocation5], 4
      %s30 = int_to_ptr.vmem [resolvable:$true] %s29
      %35 = dma.hbm_to_vmem [thread:$0]  %s1, 4096, %s30, [#allocation6], 64, 64, 4
    $region9: #{ae_forward_padded.1} parent=1 // pred_fallthru
      _
    // Predicated region
    $region10: #{ae_forward_padded.1} parent=1 // pred_check
      _
    $region11: #{ae_forward_padded.1} parent=1 // pred_check_branch
      %37 = sbr.rel (0) target = $region13
    $region12: #{ae_forward_padded.1} parent=1 // pred_region
      %s39 = ssub.s32 128, 128
      %40 = vsyncadd [#allocation6], %s39
      %s42 = sshll.u32 [#allocation7], 4
      %s43 = int_to_ptr.vmem [resolvable:$true] %s42
      %45 = dma.hbm_to_vmem [thread:$0]  %s2, 128, %s43, [#allocation6]
    $region13: #{ae_forward_padded.1} parent=1 // pred_fallthru
      _
    // Predicated region
    $region14: #{ae_forward_padded.1} parent=1 // pred_check
      _
    $region15: #{ae_forward_padded.1} parent=1 // pred_check_branch
      %47 = sbr.rel (0) target = $region17
    $region16: #{ae_forward_padded.1} parent=1 // pred_region
      %48 = dma.done [#allocation3], 128
    $region17: #{ae_forward_padded.1} parent=1 // pred_fallthru
      _
    // Predicated region
    $region18: #{ae_forward_padded.1} parent=1 // pred_check
      _
    $region19: #{ae_forward_padded.1} parent=1 // pred_check_branch
      %50 = sbr.rel (0) target = $region21
    $region20: #{ae_forward_padded.1} parent=1 // pred_region
      %51 = dma.done [#allocation6], 4096
    $region21: #{ae_forward_padded.1} parent=1 // pred_fallthru
      _
    // Predicated region
    $region22: #{ae_forward_padded.1} parent=1 // pred_check
      _
    $region23: #{ae_forward_padded.1} parent=1 // pred_check_branch
      %53 = sbr.rel (0) target = $region25
    $region24: #{ae_forward_padded.1} parent=1 // pred_region
      %54 = dma.done [#allocation6], 128
    $region25: #{ae_forward_padded.1} parent=1 // pred_fallthru
      _
    %v56 = vld [vmem:[#allocation2] sm:$0xff]
    %v57 = vpack.c.bf16 %v56, %v56
    %v58 = vld [vmem:[#allocation5] sm:$0xf]
    %v59 = vld [vmem:[#allocation5 + $0x4] sm:$0xf]
    %v60 = vld [vmem:[#allocation5 + $0x8] sm:$0xf]
    %v61 = vld [vmem:[#allocation5 + $0xc] sm:$0xf]
    %v62 = vld [vmem:[#allocation5 + $0x10] sm:$0xf]
    %v63 = vld [vmem:[#allocation5 + $0x14] sm:$0xf]
    %v64 = vld [vmem:[#allocation5 + $0x18] sm:$0xf]
    %v65 = vld [vmem:[#allocation5 + $0x1c] sm:$0xf]
    %v66 = vld [vmem:[#allocation5 + $0x20] sm:$0xf]
    %v67 = vld [vmem:[#allocation5 + $0x24] sm:$0xf]
    %v68 = vld [vmem:[#allocation5 + $0x28] sm:$0xf]
    %v69 = vld [vmem:[#allocation5 + $0x2c] sm:$0xf]
    %v70 = vld [vmem:[#allocation5 + $0x30] sm:$0xf]
    %v71 = vld [vmem:[#allocation5 + $0x34] sm:$0xf]
    %v72 = vld [vmem:[#allocation5 + $0x38] sm:$0xf]
    %v73 = vld [vmem:[#allocation5 + $0x3c] sm:$0xf]
    %v90 = vunpack.c.l.b16 %v58
    %v91 = vunpack.c.l.b16 %v59
    %v92 = vunpack.c.l.b16 %v60
    %v93 = vunpack.c.l.b16 %v61
    %v94 = vunpack.c.l.b16 %v62
    %v95 = vunpack.c.l.b16 %v63
    %v96 = vunpack.c.l.b16 %v64
    %v97 = vunpack.c.l.b16 %v65
    %v98 = vunpack.c.l.b16 %v66
    %v99 = vunpack.c.l.b16 %v67
    %v100 = vunpack.c.l.b16 %v68
    %v101 = vunpack.c.l.b16 %v69
    %v102 = vunpack.c.l.b16 %v70
    %v103 = vunpack.c.l.b16 %v71
    %v104 = vunpack.c.l.b16 %v72
    %v105 = vunpack.c.l.b16 %v73
    %v106 = vpack.c.b16 %v91, %v90
    %v107 = vpack.c.b16 %v93, %v92
    %v108 = vpack.c.b16 %v95, %v94
    %v109 = vpack.c.b16 %v97, %v96
    %v110 = vpack.c.b16 %v99, %v98
    %v111 = vpack.c.b16 %v101, %v100
    %v112 = vpack.c.b16 %v103, %v102
    %v113 = vpack.c.b16 %v105, %v104
    %122 = vmatprep.subr.bf16.mxu0 0
    %123 = vmatpush1.bf16.msra.mxu0 %v106
    %124 = vmatprep.subr.bf16.mxu0 0
    %125 = vmatpush1.bf16.msra.mxu0 %v107
    %126 = vmatprep.subr.bf16.mxu0 0
    %127 = vmatpush1.bf16.msra.mxu0 %v108
    %128 = vmatprep.subr.bf16.mxu0 0
    %129 = vmatpush1.bf16.msra.mxu0 %v109
    %130 = vmatprep.subr.bf16.mxu0 0
    %131 = vmatpush1.bf16.msra.mxu0 %v110
    %132 = vmatprep.subr.bf16.mxu0 0
    %133 = vmatpush1.bf16.msra.mxu0 %v111
    %134 = vmatprep.subr.bf16.mxu0 0
    %135 = vmatpush1.bf16.msra.mxu0 %v112
    %136 = vmatprep.subr.bf16.mxu0 0
    %137 = vmatpush1.bf16.msra.mxu0 %v113
    %138 = vmatprep.subr.bf16.mxu0 0
    %139 = vmatpush1.bf16.msra.mxu0 0
    %140 = vmatprep.subr.bf16.mxu0 0
    %141 = vmatpush1.bf16.msra.mxu0 0
    %142 = vmatprep.subr.bf16.mxu0 0
    %143 = vmatpush1.bf16.msra.mxu0 0
    %144 = vmatprep.subr.bf16.mxu0 0
    %145 = vmatpush1.bf16.msra.mxu0 0
    %146 = vmatprep.subr.bf16.mxu0 0
    %147 = vmatpush1.bf16.msra.mxu0 0
    %148 = vmatprep.subr.bf16.mxu0 0
    %149 = vmatpush1.bf16.msra.mxu0 0
    %150 = vmatprep.subr.bf16.mxu0 0
    %151 = vmatpush1.bf16.msra.mxu0 0
    %152 = vmatprep.subr.bf16.mxu0 0
    %153 = vmatpush1.bf16.msra.mxu0 0
    %154 = vmatprep.mubr.bf16.mxu0 0
    %155 = vmatmul.mubr.bf16.gmra.mrb[0].mxu0 %v57
    %v156 = vpop.f32.mrb[0].mxu0
    %v157 = vadd.f32 0.0, %v156
    %v158 = vpop.f32.mrb[0].mxu0
    %v159 = vpop.f32.mrb[0].mxu0
    %v160 = vpop.f32.mrb[0].mxu0
    %161 = vdwg.mxu0
    %v162 = vrot.slane %v157, 4
    %v163 = vadd.f32 %v157, %v162
    %v164 = vrot.slane %v163, 2
    %v165 = vadd.f32 %v163, %v164
    %v166 = vrot.slane %v165, 1
    %v167 = vadd.f32 %v165, %v166
    %v168 = vmul.f32 %v157, %v157
    %v169 = vrot.slane %v168, 4
    %v170 = vadd.f32 %v168, %v169
    %v171 = vrot.slane %v170, 2
    %v172 = vadd.f32 %v170, %v171
    %v173 = vrot.slane %v172, 1
    %v174 = vadd.f32 %v172, %v173
    %v175 = vmul.f32 %v167, 0.125
    %v176 = vmul.f32 %v174, 0.125
    %v177 = vmul.f32 %v175, %v175
    %v178 = vsub.f32 %v176, %v177
    %v179 = vmax.f32 %v178, 0.0
    %v180 = vld [vmem:[#allocation7] sm:$0x1]
    %v181 = vadd.f32 %v179, 1e-05
    %v182 = vrsqrt.pop %v181
    %v183 = vmul.f32 %v180, %v182
    %v184 = vsub.f32 %v157, %v175
    %v185 = vlaneseq
    %v186 = vshrl.u32 %v185, 7
    %v187 = vsub.s32 0, %v186
    %v188 = vrot.slane %v183, %v187
    %v189 = vmul.f32 %v184, %v188
    %v190 = vld [vmem:[#allocation7 + $0x1] sm:$0x1]
    %v191 = vlaneseq
    %v192 = vshrl.u32 %v191, 7
    %v193 = vsub.s32 0, %v192
    %v194 = vrot.slane %v190, %v193
    %v195 = vadd.f32 %v189, %v194
    %vm196 = vcmp.gt.f32.partialorder %v195, 0.0
    %v197 = vmul.f32 %v195, 0.01
    %v198 = vsel %vm196, %v195, %v197
    %v199 = vpack.c.bf16 %v198, %v198
    %s200 = scalar_lea.vmem [#allocation5], 64
    %v201 = vld [vmem:[%s200] sm:$0xf]
    %v202 = vld [vmem:[%s200 + $0x4] sm:$0xf]
    %v203 = vld [vmem:[%s200 + $0x8] sm:$0xf]
    %v204 = vld [vmem:[%s200 + $0xc] sm:$0xf]
    %v205 = vld [vmem:[%s200 + $0x10] sm:$0xf]
    %v206 = vld [vmem:[%s200 + $0x14] sm:$0xf]
    %v207 = vld [vmem:[%s200 + $0x18] sm:$0xf]
    %v208 = vld [vmem:[%s200 + $0x1c] sm:$0xf]
    %v209 = vld [vmem:[%s200 + $0x20] sm:$0xf]
    %v210 = vld [vmem:[%s200 + $0x24] sm:$0xf]
    %v211 = vld [vmem:[%s200 + $0x28] sm:$0xf]
    %v212 = vld [vmem:[%s200 + $0x2c] sm:$0xf]
    %v213 = vld [vmem:[%s200 + $0x30] sm:$0xf]
    %v214 = vld [vmem:[%s200 + $0x34] sm:$0xf]
    %v215 = vld [vmem:[%s200 + $0x38] sm:$0xf]
    %v216 = vld [vmem:[%s200 + $0x3c] sm:$0xf]
    %v233 = vunpack.c.l.b16 %v201
    %v234 = vunpack.c.l.b16 %v202
    %v235 = vunpack.c.l.b16 %v203
    %v236 = vunpack.c.l.b16 %v204
    %v237 = vunpack.c.l.b16 %v205
    %v238 = vunpack.c.l.b16 %v206
    %v239 = vunpack.c.l.b16 %v207
    %v240 = vunpack.c.l.b16 %v208
    %v241 = vunpack.c.l.b16 %v209
    %v242 = vunpack.c.l.b16 %v210
    %v243 = vunpack.c.l.b16 %v211
    %v244 = vunpack.c.l.b16 %v212
    %v245 = vunpack.c.l.b16 %v213
    %v246 = vunpack.c.l.b16 %v214
    %v247 = vunpack.c.l.b16 %v215
    %v248 = vunpack.c.l.b16 %v216
    %v249 = vpack.c.b16 %v234, %v233
    %v250 = vpack.c.b16 %v236, %v235
    %v251 = vpack.c.b16 %v238, %v237
    %v252 = vpack.c.b16 %v240, %v239
    %v253 = vpack.c.b16 %v242, %v241
    %v254 = vpack.c.b16 %v244, %v243
    %v255 = vpack.c.b16 %v246, %v245
    %v256 = vpack.c.b16 %v248, %v247
    %265 = vmatprep.subr.bf16.mxu0 0
    %266 = vmatpush1.bf16.msra.mxu0 %v249
    %267 = vmatprep.subr.bf16.mxu0 0
    %268 = vmatpush1.bf16.msra.mxu0 %v250
    %269 = vmatprep.subr.bf16.mxu0 0
    %270 = vmatpush1.bf16.msra.mxu0 %v251
    %271 = vmatprep.subr.bf16.mxu0 0
    %272 = vmatpush1.bf16.msra.mxu0 %v252
    %273 = vmatprep.subr.bf16.mxu0 0
    %274 = vmatpush1.bf16.msra.mxu0 %v253
    %275 = vmatprep.subr.bf16.mxu0 0
    %276 = vmatpush1.bf16.msra.mxu0 %v254
    %277 = vmatprep.subr.bf16.mxu0 0
    %278 = vmatpush1.bf16.msra.mxu0 %v255
    %279 = vmatprep.subr.bf16.mxu0 0
    %280 = vmatpush1.bf16.msra.mxu0 %v256
    %281 = vmatprep.subr.bf16.mxu0 0
    %282 = vmatpush1.bf16.msra.mxu0 0
    %283 = vmatprep.subr.bf16.mxu0 0
    %284 = vmatpush1.bf16.msra.mxu0 0
    %285 = vmatprep.subr.bf16.mxu0 0
    %286 = vmatpush1.bf16.msra.mxu0 0
    %287 = vmatprep.subr.bf16.mxu0 0
    %288 = vmatpush1.bf16.msra.mxu0 0
    %289 = vmatprep.subr.bf16.mxu0 0
    %290 = vmatpush1.bf16.msra.mxu0 0
    %291 = vmatprep.subr.bf16.mxu0 0
    %292 = vmatpush1.bf16.msra.mxu0 0
    %293 = vmatprep.subr.bf16.mxu0 0
    %294 = vmatpush1.bf16.msra.mxu0 0
    %295 = vmatprep.subr.bf16.mxu0 0
    %296 = vmatpush1.bf16.msra.mxu0 0
    %297 = vmatprep.mubr.bf16.mxu0 0
    %298 = vmatmul.mubr.bf16.gmra.mrb[0].mxu0 %v199
    %v299 = vpop.f32.mrb[0].mxu0
    %v300 = vadd.f32 0.0, %v299
    %v301 = vpop.f32.mrb[0].mxu0
    %v302 = vpop.f32.mrb[0].mxu0
    %v303 = vpop.f32.mrb[0].mxu0
    %304 = vdwg.mxu0
    %v305 = vrot.slane %v300, 4
    %v306 = vadd.f32 %v300, %v305
    %v307 = vrot.slane %v306, 2
    %v308 = vadd.f32 %v306, %v307
    %v309 = vrot.slane %v308, 1
    %v310 = vadd.f32 %v308, %v309
    %v311 = vmul.f32 %v300, %v300
    %v312 = vrot.slane %v311, 4
    %v313 = vadd.f32 %v311, %v312
    %v314 = vrot.slane %v313, 2
    %v315 = vadd.f32 %v313, %v314
    %v316 = vrot.slane %v315, 1
    %v317 = vadd.f32 %v315, %v316
    %v318 = vmul.f32 %v310, 0.125
    %v319 = vmul.f32 %v317, 0.125
    %v320 = vmul.f32 %v318, %v318
    %v321 = vsub.f32 %v319, %v320
    %v322 = vmax.f32 %v321, 0.0
    %v323 = vld [vmem:[#allocation7 + $0x2] sm:$0x1]
    %v324 = vadd.f32 %v322, 1e-05
    %v325 = vrsqrt.pop %v324
    %v326 = vmul.f32 %v323, %v325
    %v327 = vsub.f32 %v300, %v318
    %v328 = vlaneseq
    %v329 = vshrl.u32 %v328, 7
    %v330 = vsub.s32 0, %v329
    %v331 = vrot.slane %v326, %v330
    %v332 = vmul.f32 %v327, %v331
    %v333 = vld [vmem:[#allocation7 + $0x3] sm:$0x1]
    %v334 = vlaneseq
    %v335 = vshrl.u32 %v334, 7
    %v336 = vsub.s32 0, %v335
    %v337 = vrot.slane %v333, %v336
    %v338 = vadd.f32 %v332, %v337
    %vm339 = vcmp.gt.f32.partialorder %v338, 0.0
    %v340 = vmul.f32 %v338, 0.01
    %v341 = vsel %vm339, %v338, %v340
    %342 = vst [vmem:[#allocation8] sm:$0xff] %v341
    %v343 = vpack.c.bf16 %v341, %v341
    %s344 = scalar_lea.vmem [#allocation5], 128
    %v345 = vld [vmem:[%s344] sm:$0xf]
    %v346 = vld [vmem:[%s344 + $0x4] sm:$0xf]
    %v347 = vld [vmem:[%s344 + $0x8] sm:$0xf]
    %v348 = vld [vmem:[%s344 + $0xc] sm:$0xf]
    %v349 = vld [vmem:[%s344 + $0x10] sm:$0xf]
    %v350 = vld [vmem:[%s344 + $0x14] sm:$0xf]
    %v351 = vld [vmem:[%s344 + $0x18] sm:$0xf]
    %v352 = vld [vmem:[%s344 + $0x1c] sm:$0xf]
    %v353 = vld [vmem:[%s344 + $0x20] sm:$0xf]
    %v354 = vld [vmem:[%s344 + $0x24] sm:$0xf]
    %v355 = vld [vmem:[%s344 + $0x28] sm:$0xf]
    %v356 = vld [vmem:[%s344 + $0x2c] sm:$0xf]
    %v357 = vld [vmem:[%s344 + $0x30] sm:$0xf]
    %v358 = vld [vmem:[%s344 + $0x34] sm:$0xf]
    %v359 = vld [vmem:[%s344 + $0x38] sm:$0xf]
    %v360 = vld [vmem:[%s344 + $0x3c] sm:$0xf]
    %v377 = vunpack.c.l.b16 %v345
    %v378 = vunpack.c.l.b16 %v346
    %v379 = vunpack.c.l.b16 %v347
    %v380 = vunpack.c.l.b16 %v348
    %v381 = vunpack.c.l.b16 %v349
    %v382 = vunpack.c.l.b16 %v350
    %v383 = vunpack.c.l.b16 %v351
    %v384 = vunpack.c.l.b16 %v352
    %v385 = vunpack.c.l.b16 %v353
    %v386 = vunpack.c.l.b16 %v354
    %v387 = vunpack.c.l.b16 %v355
    %v388 = vunpack.c.l.b16 %v356
    %v389 = vunpack.c.l.b16 %v357
    %v390 = vunpack.c.l.b16 %v358
    %v391 = vunpack.c.l.b16 %v359
    %v392 = vunpack.c.l.b16 %v360
    %v393 = vpack.c.b16 %v378, %v377
    %v394 = vpack.c.b16 %v380, %v379
    %v395 = vpack.c.b16 %v382, %v381
    %v396 = vpack.c.b16 %v384, %v383
    %v397 = vpack.c.b16 %v386, %v385
    %v398 = vpack.c.b16 %v388, %v387
    %v399 = vpack.c.b16 %v390, %v389
    %v400 = vpack.c.b16 %v392, %v391
    %409 = vmatprep.subr.bf16.mxu0 0
    %410 = vmatpush1.bf16.msra.mxu0 %v393
    %411 = vmatprep.subr.bf16.mxu0 0
    %412 = vmatpush1.bf16.msra.mxu0 %v394
    %413 = vmatprep.subr.bf16.mxu0 0
    %414 = vmatpush1.bf16.msra.mxu0 %v395
    %415 = vmatprep.subr.bf16.mxu0 0
    %416 = vmatpush1.bf16.msra.mxu0 %v396
    %417 = vmatprep.subr.bf16.mxu0 0
    %418 = vmatpush1.bf16.msra.mxu0 %v397
    %419 = vmatprep.subr.bf16.mxu0 0
    %420 = vmatpush1.bf16.msra.mxu0 %v398
    %421 = vmatprep.subr.bf16.mxu0 0
    %422 = vmatpush1.bf16.msra.mxu0 %v399
    %423 = vmatprep.subr.bf16.mxu0 0
    %424 = vmatpush1.bf16.msra.mxu0 %v400
    %425 = vmatprep.subr.bf16.mxu0 0
    %426 = vmatpush1.bf16.msra.mxu0 0
    %427 = vmatprep.subr.bf16.mxu0 0
    %428 = vmatpush1.bf16.msra.mxu0 0
    %429 = vmatprep.subr.bf16.mxu0 0
    %430 = vmatpush1.bf16.msra.mxu0 0
    %431 = vmatprep.subr.bf16.mxu0 0
    %432 = vmatpush1.bf16.msra.mxu0 0
    %433 = vmatprep.subr.bf16.mxu0 0
    %434 = vmatpush1.bf16.msra.mxu0 0
    %435 = vmatprep.subr.bf16.mxu0 0
    %436 = vmatpush1.bf16.msra.mxu0 0
    %437 = vmatprep.subr.bf16.mxu0 0
    %438 = vmatpush1.bf16.msra.mxu0 0
    %439 = vmatprep.subr.bf16.mxu0 0
    %440 = vmatpush1.bf16.msra.mxu0 0
    %441 = vmatprep.mubr.bf16.mxu0 0
    %442 = vmatmul.mubr.bf16.gmra.mrb[0].mxu0 %v343
    %v443 = vpop.f32.mrb[0].mxu0
    %v444 = vadd.f32 0.0, %v443
    %v445 = vpop.f32.mrb[0].mxu0
    %v446 = vpop.f32.mrb[0].mxu0
    %v447 = vpop.f32.mrb[0].mxu0
    %448 = vdwg.mxu0
    %v449 = vrot.slane %v444, 4
    %v450 = vadd.f32 %v444, %v449
    %v451 = vrot.slane %v450, 2
    %v452 = vadd.f32 %v450, %v451
    %v453 = vrot.slane %v452, 1
    %v454 = vadd.f32 %v452, %v453
    %v455 = vmul.f32 %v444, %v444
    %v456 = vrot.slane %v455, 4
    %v457 = vadd.f32 %v455, %v456
    %v458 = vrot.slane %v457, 2
    %v459 = vadd.f32 %v457, %v458
    %v460 = vrot.slane %v459, 1
    %v461 = vadd.f32 %v459, %v460
    %v462 = vmul.f32 %v454, 0.125
    %v463 = vmul.f32 %v461, 0.125
    %v464 = vmul.f32 %v462, %v462
    %v465 = vsub.f32 %v463, %v464
    %v466 = vmax.f32 %v465, 0.0
    %v467 = vld [vmem:[#allocation7 + $0x4] sm:$0x1]
    %v468 = vadd.f32 %v466, 1e-05
    %v469 = vrsqrt.pop %v468
    %v470 = vmul.f32 %v467, %v469
    %v471 = vsub.f32 %v444, %v462
    %v472 = vlaneseq
    %v473 = vshrl.u32 %v472, 7
    %v474 = vsub.s32 0, %v473
    %v475 = vrot.slane %v470, %v474
    %v476 = vmul.f32 %v471, %v475
    %v477 = vld [vmem:[#allocation7 + $0x5] sm:$0x1]
    %v478 = vlaneseq
    %v479 = vshrl.u32 %v478, 7
    %v480 = vsub.s32 0, %v479
    %v481 = vrot.slane %v477, %v480
    %v482 = vadd.f32 %v476, %v481
    %vm483 = vcmp.gt.f32.partialorder %v482, 0.0
    %v484 = vmul.f32 %v482, 0.01
    %v485 = vsel %vm483, %v482, %v484
    %v486 = vpack.c.bf16 %v485, %v485
    %s487 = scalar_lea.vmem [#allocation5], 192
    %v488 = vld [vmem:[%s487] sm:$0xf]
    %v489 = vld [vmem:[%s487 + $0x4] sm:$0xf]
    %v490 = vld [vmem:[%s487 + $0x8] sm:$0xf]
    %v491 = vld [vmem:[%s487 + $0xc] sm:$0xf]
    %v492 = vld [vmem:[%s487 + $0x10] sm:$0xf]
    %v493 = vld [vmem:[%s487 + $0x14] sm:$0xf]
    %v494 = vld [vmem:[%s487 + $0x18] sm:$0xf]
    %v495 = vld [vmem:[%s487 + $0x1c] sm:$0xf]
    %v496 = vld [vmem:[%s487 + $0x20] sm:$0xf]
    %v497 = vld [vmem:[%s487 + $0x24] sm:$0xf]
    %v498 = vld [vmem:[%s487 + $0x28] sm:$0xf]
    %v499 = vld [vmem:[%s487 + $0x2c] sm:$0xf]
    %v500 = vld [vmem:[%s487 + $0x30] sm:$0xf]
    %v501 = vld [vmem:[%s487 + $0x34] sm:$0xf]
    %v502 = vld [vmem:[%s487 + $0x38] sm:$0xf]
    %v503 = vld [vmem:[%s487 + $0x3c] sm:$0xf]
    %v504 = vld [vmem:[#allocation7 + $0x6] sm:$0x1]
    %v505 = vlaneseq
    %v506 = vshrl.u32 %v505, 7
    %v507 = vsub.s32 0, %v506
    %v508 = vrot.slane %v504, %v507
    %v525 = vunpack.c.l.b16 %v488
    %v526 = vunpack.c.l.b16 %v489
    %v527 = vunpack.c.l.b16 %v490
    %v528 = vunpack.c.l.b16 %v491
    %v529 = vunpack.c.l.b16 %v492
    %v530 = vunpack.c.l.b16 %v493
    %v531 = vunpack.c.l.b16 %v494
    %v532 = vunpack.c.l.b16 %v495
    %v533 = vunpack.c.l.b16 %v496
    %v534 = vunpack.c.l.b16 %v497
    %v535 = vunpack.c.l.b16 %v498
    %v536 = vunpack.c.l.b16 %v499
    %v537 = vunpack.c.l.b16 %v500
    %v538 = vunpack.c.l.b16 %v501
    %v539 = vunpack.c.l.b16 %v502
    %v540 = vunpack.c.l.b16 %v503
    %v541 = vpack.c.b16 %v526, %v525
    %v542 = vpack.c.b16 %v528, %v527
    %v543 = vpack.c.b16 %v530, %v529
    %v544 = vpack.c.b16 %v532, %v531
    %v545 = vpack.c.b16 %v534, %v533
    %v546 = vpack.c.b16 %v536, %v535
    %v547 = vpack.c.b16 %v538, %v537
    %v548 = vpack.c.b16 %v540, %v539
    %557 = vmatprep.subr.bf16.mxu0 0
    %558 = vmatpush1.bf16.msra.mxu0 %v541
    %559 = vmatprep.subr.bf16.mxu0 0
    %560 = vmatpush1.bf16.msra.mxu0 %v542
    %561 = vmatprep.subr.bf16.mxu0 0
    %562 = vmatpush1.bf16.msra.mxu0 %v543
    %563 = vmatprep.subr.bf16.mxu0 0
    %564 = vmatpush1.bf16.msra.mxu0 %v544
    %565 = vmatprep.subr.bf16.mxu0 0
    %566 = vmatpush1.bf16.msra.mxu0 %v545
    %567 = vmatprep.subr.bf16.mxu0 0
    %568 = vmatpush1.bf16.msra.mxu0 %v546
    %569 = vmatprep.subr.bf16.mxu0 0
    %570 = vmatpush1.bf16.msra.mxu0 %v547
    %571 = vmatprep.subr.bf16.mxu0 0
    %572 = vmatpush1.bf16.msra.mxu0 %v548
    %573 = vmatprep.subr.bf16.mxu0 0
    %574 = vmatpush1.bf16.msra.mxu0 0
    %575 = vmatprep.subr.bf16.mxu0 0
    %576 = vmatpush1.bf16.msra.mxu0 0
    %577 = vmatprep.subr.bf16.mxu0 0
    %578 = vmatpush1.bf16.msra.mxu0 0
    %579 = vmatprep.subr.bf16.mxu0 0
    %580 = vmatpush1.bf16.msra.mxu0 0
    %581 = vmatprep.subr.bf16.mxu0 0
    %582 = vmatpush1.bf16.msra.mxu0 0
    %583 = vmatprep.subr.bf16.mxu0 0
    %584 = vmatpush1.bf16.msra.mxu0 0
    %585 = vmatprep.subr.bf16.mxu0 0
    %586 = vmatpush1.bf16.msra.mxu0 0
    %587 = vmatprep.subr.bf16.mxu0 0
    %588 = vmatpush1.bf16.msra.mxu0 0
    %589 = vmatprep.mubr.bf16.mxu0 0
    %590 = vmatmul.mubr.bf16.gmra.mrb[0].mxu0 %v486
    %v591 = vpop.f32.mrb[0].mxu0
    %v592 = vadd.f32 %v508, %v591
    %v593 = vpop.f32.mrb[0].mxu0
    %v594 = vpop.f32.mrb[0].mxu0
    %v595 = vpop.f32.mrb[0].mxu0
    %596 = vdwg.mxu0
    %597 = vst [vmem:[#allocation9] sm:$0xff] %v592
    // Predicated region
    $region26: #{ae_forward_padded.1} parent=1 // pred_check
      _
    $region27: #{ae_forward_padded.1} parent=1 // pred_check_branch
      %599 = sbr.rel (0) target = $region29
    $region28: #{ae_forward_padded.1} parent=1 // pred_region
      %s601 = ssub.s32 128, 128
      %602 = vsyncadd [#allocation4], %s601
      %s604 = sshll.u32 [#allocation8], 4
      %s605 = int_to_ptr.vmem [resolvable:$true] %s604
      %607 = dma.vmem_to_hbm [thread:$0]  %s605, 128, %s3, [#allocation4]
    $region29: #{ae_forward_padded.1} parent=1 // pred_fallthru
      _
    // Predicated region
    $region30: #{ae_forward_padded.1} parent=1 // pred_check
      _
    $region31: #{ae_forward_padded.1} parent=1 // pred_check_branch
      %609 = sbr.rel (0) target = $region33
    $region32: #{ae_forward_padded.1} parent=1 // pred_region
      %s611 = ssub.s32 128, 128
      %612 = vsyncadd [#allocation10], %s611
      %s614 = sshll.u32 [#allocation9], 4
      %s615 = int_to_ptr.vmem [resolvable:$true] %s614
      %617 = dma.vmem_to_hbm [thread:$0]  %s615, 128, %s4, [#allocation10]
    $region33: #{ae_forward_padded.1} parent=1 // pred_fallthru
      _
    // Predicated region
    $region34: #{ae_forward_padded.1} parent=1 // pred_check
      _
    $region35: #{ae_forward_padded.1} parent=1 // pred_check_branch
      %619 = sbr.rel (0) target = $region37
    $region36: #{ae_forward_padded.1} parent=1 // pred_region
      %620 = dma.done [#allocation4], 128
    $region37: #{ae_forward_padded.1} parent=1 // pred_fallthru
      _
    // Predicated region
    $region38: #{ae_forward_padded.1} parent=1 // pred_check
      _
    $region39: #{ae_forward_padded.1} parent=1 // pred_check_branch
      %622 = sbr.rel (0) target = $region41
    $region40: #{ae_forward_padded.1} parent=1 // pred_region
      %623 = dma.done [#allocation10], 128
    $region41: #{ae_forward_padded.1} parent=1 // pred_fallthru
      _
    %624 = vsyncpa [#allocation3], 1
    %625 = vsyncpa [#allocation6], 1
    %626 = vsyncpa [#allocation4], 1
    %627 = vsyncpa [#allocation10], 1

</llo_original>
